<compile_context>
chip_gen: v5e
topology: v5e:2x2
jax: 0.10.0
libtpu: 0.0.40
codegen_flags: <defaults>
</compile_context>

<pallas_src>
import jax
import jax.numpy as jnp
from jax import lax
from jax.experimental import pallas as pl
from jax.experimental.pallas import tpu as pltpu


def _round_up(a, b):
    return -(-a // b) * b


def _time_embed_kernel(x_ref, s_ref, c_ref, o_ref):
    # x_ref: (tm_r, G)    grouped raw time values (G consecutive time steps per row)
    # s_ref: (G, G*D)     0/1 lane-replication selector (exact under HIGHEST matmul)
    # c_ref: (3, G*D)     row 0 = tiled fused weight * (1/288), row 1 = tiled bias,
    #                     row 2 = 1.0 on the Linear(1,1) lane of each D-group else 0.0
    # o_ref: (tm_r, G*D)  lane-dense output block (full-width vst)
    ti = jnp.trunc(x_ref[...].astype(jnp.float32))          # .long() truncation
    # Replicate each time value across its D-lane group on the (idle) MXU.
    t_rep = jnp.dot(ti, s_ref[...],
                    preferred_element_type=jnp.float32,
                    precision=lax.Precision.HIGHEST)         # exact for |t| < 2^16
    w = c_ref[0:1, :]
    b = c_ref[1:2, :]
    is_lin = c_ref[2:3, :]
    lin = t_rep * w + b                                      # (tm_r, G*D)
    # lane (j*D + 0) is the plain Linear(1,1) branch, lanes (j*D + 1..D-1) are sin.
    o_ref[...] = jnp.where(is_lin != 0.0, lin, jnp.sin(lin)).astype(o_ref.dtype)


def time_embedding_pallas(x, w_lin, b_lin, w_sin, b_sin, *,
                          tm_rows_max=1024, out_dtype=jnp.float32,
                          force_pallas=False, min_pallas_out_elems=64 * 1024):
    """x: [B, N, T]; returns [B, N, T, D] (dropout = eval/identity)."""
    B, N, T = x.shape
    wl = jnp.asarray(w_lin, jnp.float32).reshape(-1)   # (1,)
    bl = jnp.asarray(b_lin, jnp.float32).reshape(-1)   # (1,)
    ws = jnp.asarray(w_sin, jnp.float32).reshape(-1)   # (D-1,)
    bs = jnp.asarray(b_sin, jnp.float32).reshape(-1)   # (D-1,)
    D = 1 + int(ws.shape[0])
    M = B * N * T

    # Small-problem fallback: fixed pallas_call overhead dominates; XLA fuses this.
    if not force_pallas and M * D < min_pallas_out_elems:
        return _ref_forward(x, wl, bl, ws, bs).astype(out_dtype)

    # Pack G consecutive time steps per output row so the store is 128-lane dense.
    # (If D does not divide 128, G=1 and stores degrade to masked vst — still correct.)
    G = 128 // D if (0 < D <= 128 and 128 % D == 0) else 1
    LANES = G * D
    Mr = -(-M // G)                                   # grouped rows (exact)

    # --- tile / grid selection: aim for ~8 pipelined steps (2 TCs x 4) ----------
    tm_r = _round_up(-(-Mr // 8), 8)
    tm_r = min(max(tm_r, 256), max(tm_rows_max, 8))
    tm_r = min(tm_r, _round_up(Mr, 8))
    tm_r = max(8, (tm_r // 8) * 8)
    grid = -(-Mr // tm_r)
    if grid > 1 and grid % 2 == 1:                    # even split across v7x's 2 TCs
        alt = max(8, _round_up(-(-Mr // (grid + 1)), 8))
        if -(-Mr // alt) % 2 == 0:
            tm_r, grid = alt, -(-Mr // alt)

    # --- dense grouped input, zero-padded so input reads are never ragged -------
    rows_in = grid * tm_r
    x_flat = x.reshape(-1).astype(jnp.float32)
    pad = rows_in * G - M
    if pad:
        x_flat = jnp.concatenate([x_flat, jnp.zeros((pad,), jnp.float32)])
    xg = x_flat.reshape(rows_in, G)

    # --- constants: 0/1 selector (G, LANES) + fused (weight/288, bias, lin-mask) -
    sel = jnp.kron(jnp.eye(G, dtype=jnp.float32), jnp.ones((1, D), jnp.float32))
    w_fused = jnp.concatenate([wl, ws]) * (1.0 / 288.0)          # (D,)
    b_fused = jnp.concatenate([bl, bs])                          # (D,)
    lin_mask = jnp.zeros((D,), jnp.float32).at[0].set(1.0)       # (D,)
    C = jnp.stack([jnp.tile(w_fused, G), jnp.tile(b_fused, G), jnp.tile(lin_mask, G)])

    out = pl.pallas_call(
        _time_embed_kernel,
        out_shape=jax.ShapeDtypeStruct((Mr, LANES), out_dtype),   # exact rows: ragged
        grid=(grid,),                                             # last block is masked
        in_specs=[
            pl.BlockSpec((tm_r, G), lambda i: (i, 0)),
            pl.BlockSpec((G, LANES), lambda i: (0, 0)),           # constant, DMA'd once
            pl.BlockSpec((3, LANES), lambda i: (0, 0)),           # constant, DMA'd once
        ],
        out_specs=pl.BlockSpec((tm_r, LANES), lambda i: (i, 0)),
        compiler_params=pltpu.CompilerParams(
            dimension_semantics=("parallel",),
        ),
    )(xg, sel, C)

    # Row-major bytes identical: [Mr, G*D] -> [Mr*G, D] is a free bitcast reshape.
    out_flat = out.reshape(Mr * G, D)
    if Mr * G != M:            # only when B*N*T is not a multiple of G (<= G-1 rows)
        out_flat = out_flat[:M]
    return out_flat.reshape(B, N, T, D)


def _ref_forward(x, w_lin, b_lin, w_sin, b_sin):
    """Pure-JAX reference of the PyTorch forward (eval mode)."""
    wl = jnp.asarray(w_lin, jnp.float32).reshape(-1)
    bl = jnp.asarray(b_lin, jnp.float32).reshape(-1)
    ws = jnp.asarray(w_sin, jnp.float32).reshape(-1)
    bs = jnp.asarray(b_sin, jnp.float32).reshape(-1)
    t = (jnp.trunc(x).astype(jnp.float32) / 288.0)[..., None]     # [B,N,T,1]
    x1 = t * wl + bl                                              # [B,N,T,1]
    x2 = jnp.sin(t * ws + bs)                                     # [B,N,T,D-1]
    return jnp.concatenate([x1, x2], axis=-1)


if __name__ == "__main__":
    num_embedding = 288          # unused by forward (kept for parity with __init__)
    embedding_dim = 32
    dropout_p = 0.1              # TODO(synk): training-mode dropout not applied (eval/identity)

    key = jax.random.PRNGKey(0)
    k_x, k_wl, k_bl, k_ws, k_bs, k_x2 = jax.random.split(key, 6)

    # Deterministic "Linear"-style init (uniform in [-1, 1] since fan_in = 1).
    w_lin = jax.random.uniform(k_wl, (1, 1), jnp.float32, -1.0, 1.0)   # Linear(1,1).weight
    b_lin = jax.random.uniform(k_bl, (1,), jnp.float32, -1.0, 1.0)     # Linear(1,1).bias
    w_sin = jax.random.uniform(k_ws, (embedding_dim - 1, 1), jnp.float32, -1.0, 1.0)
    b_sin = jax.random.uniform(k_bs, (embedding_dim - 1,), jnp.float32, -1.0, 1.0)

    # Small shape: forced through the Pallas path to exercise the kernel itself.
    B, N, T = 2, 4, 16
    x_small = jax.random.randint(k_x, (B, N, T), 0, 288).astype(jnp.float32)
    out_small = jax.block_until_ready(
        time_embedding_pallas(x_small, w_lin, b_lin, w_sin, b_sin, force_pallas=True))
    ref_small = _ref_forward(x_small, w_lin, b_lin, w_sin, b_sin)
    assert out_small.shape == (B, N, T, embedding_dim), out_small.shape
    assert jnp.allclose(out_small, ref_small, atol=1e-5, rtol=1e-5), "small-shape mismatch"

    # Medium shape: takes the Pallas path automatically; exercises the multi-step,
    # even-grid pipelined tiling.
    B2, N2, T2 = 4, 32, 288
    x_med = jax.random.randint(k_x2, (B2, N2, T2), 0, 288).astype(jnp.float32)
    out_med = jax.block_until_ready(
        time_embedding_pallas(x_med, w_lin, b_lin, w_sin, b_sin))
    ref_med = _ref_forward(x_med, w_lin, b_lin, w_sin, b_sin)
    assert out_med.shape == (B2, N2, T2, embedding_dim), out_med.shape
    assert jnp.allclose(out_med, ref_med, atol=1e-5, rtol=1e-5), "medium-shape mismatch"

    print("KERNEL_OK")
</pallas_src>

<mosaic_0001>
module attributes {stable_mosaic.version = 11 : i64} {
  func.func @_time_embed_kernel(%arg0: i32, %arg1: memref<32x4xf32, #tpu.memory_space<vmem>>, %arg2: memref<4x128xf32, #tpu.memory_space<vmem>>, %arg3: memref<3x128xf32, #tpu.memory_space<vmem>>, %arg4: memref<32x128xf32, #tpu.memory_space<vmem>>) attributes {dimension_semantics = [#tpu.dimension_semantics<parallel>], iteration_bounds = array<i64: 1>, scalar_prefetch = 0 : i64, scratch_operands = 0 : i64, tpu.core_type = #tpu.core_type<tc>, window_params = [{transform_indices = @transform_0, window_bounds = array<i64: 32, 4>}, {pipeline_mode = #tpu.pipeline_mode<synchronous>, transform_indices = @transform_1, window_bounds = array<i64: 4, 128>}, {pipeline_mode = #tpu.pipeline_mode<synchronous>, transform_indices = @transform_2, window_bounds = array<i64: 3, 128>}, {transform_indices = @transform_3, window_bounds = array<i64: 32, 128>}]} {
    %c0 = arith.constant 0 : index
    %c0_0 = arith.constant 0 : index
    %0 = vector.load %arg1[%c0, %c0_0] : memref<32x4xf32, #tpu.memory_space<vmem>>, vector<32x4xf32>
    %cst = arith.constant 0.000000e+00 : f32
    %1 = vector.broadcast %cst : f32 to vector<32x4xf32>
    %2 = arith.cmpf olt, %0, %1 : vector<32x4xf32>
    %3 = math.ceil %0 : vector<32x4xf32>
    %4 = math.floor %0 : vector<32x4xf32>
    %5 = arith.select %2, %3, %4 : vector<32x4xi1>, vector<32x4xf32>
    %c0_1 = arith.constant 0 : index
    %c0_2 = arith.constant 0 : index
    %6 = vector.load %arg2[%c0_1, %c0_2] : memref<4x128xf32, #tpu.memory_space<vmem>>, vector<4x128xf32>
    %cst_3 = arith.constant dense<0.000000e+00> : vector<32x128xf32>
    %7 = tpu.matmul %5, %6, %cst_3 {dimension_numbers = #tpu.dot_dimension_numbers<[1], [0], [0], [1], [0, 0, 1, 1], [], []>, precision = #tpu.contract_precision<fp32>} : vector<32x4xf32>, vector<4x128xf32>, vector<32x128xf32> -> vector<32x128xf32>
    %c0_4 = arith.constant 0 : index
    %c0_5 = arith.constant 0 : index
    %8 = vector.load %arg3[%c0_4, %c0_5] : memref<3x128xf32, #tpu.memory_space<vmem>>, vector<1x128xf32>
    %c1 = arith.constant 1 : index
    %c0_6 = arith.constant 0 : index
    %9 = vector.load %arg3[%c1, %c0_6] : memref<3x128xf32, #tpu.memory_space<vmem>>, vector<1x128xf32>
    %c2 = arith.constant 2 : index
    %c0_7 = arith.constant 0 : index
    %10 = vector.load %arg3[%c2, %c0_7] : memref<3x128xf32, #tpu.memory_space<vmem>>, vector<1x128xf32>
    %11 = vector.broadcast %8 : vector<1x128xf32> to vector<32x128xf32>
    %12 = arith.mulf %7, %11 : vector<32x128xf32>
    %13 = vector.broadcast %9 : vector<1x128xf32> to vector<32x128xf32>
    %14 = arith.addf %12, %13 : vector<32x128xf32>
    %cst_8 = arith.constant 0.000000e+00 : f32
    %15 = vector.broadcast %cst_8 : f32 to vector<1x128xf32>
    %16 = arith.cmpf one, %10, %15 : vector<1x128xf32>
    %17 = math.sin %14 : vector<32x128xf32>
    %18 = vector.shape_cast %16 : vector<1x128xi1> to vector<1x128xi1>
    %19 = vector.broadcast %18 : vector<1x128xi1> to vector<32x128xi1>
    %20 = arith.select %19, %14, %17 : vector<32x128xi1>, vector<32x128xf32>
    %c0_9 = arith.constant 0 : index
    %c0_10 = arith.constant 0 : index
    %21 = vector.load %arg4[%c0_9, %c0_10] : memref<32x128xf32, #tpu.memory_space<vmem>>, vector<32x128xf32>
    tpu.vector_store %arg4[%c0_9, %c0_10], %20 {strides = array<i32>} : memref<32x128xf32, #tpu.memory_space<vmem>>, vector<32x128xf32>,
    return
  }
  func.func @transform_0(%arg0: i32) -> (i32, i32) {
    %c0_i32 = arith.constant 0 : i32
    %c0_i32_0 = arith.constant 0 : i32
    return %arg0, %c0_i32 : i32, i32
  }
  func.func @transform_1(%arg0: i32) -> (i32, i32) {
    %c0_i32 = arith.constant 0 : i32
    %c0_i32_0 = arith.constant 0 : i32
    %c0_i32_1 = arith.constant 0 : i32
    return %c0_i32, %c0_i32_0 : i32, i32
  }
  func.func @transform_2(%arg0: i32) -> (i32, i32) {
    %c0_i32 = arith.constant 0 : i32
    %c0_i32_0 = arith.constant 0 : i32
    %c0_i32_1 = arith.constant 0 : i32
    return %c0_i32, %c0_i32_0 : i32, i32
  }
  func.func @transform_3(%arg0: i32) -> (i32, i32) {
    %c0_i32 = arith.constant 0 : i32
    %c0_i32_0 = arith.constant 0 : i32
    return %arg0, %c0_i32 : i32, i32
  }
}

</mosaic_0001>

<llo_original>
// kernel: tpu_custom_call.1
$region0: #{tpu_custom_call.1}
  #allocation0 [shape = 'u32[]', space=smem, size = 0x4, offset = 0x4, fixed_abs, tag = 'smem constant byte address 0x4 - core index']
  #allocation1 [shape = 'u32[72,128]{1,0:T(1,128)}', space=vmem, size = 0x9000, scoped, tag = 'internal scratch']
  %s0 = inlined_call_operand.vmem [shape: f32[32,4], index: 0, kind: input, shape index: {}]
  %s1 = inlined_call_operand.vmem [shape: f32[4,128], index: 1, kind: input, shape index: {}]
  %s2 = inlined_call_operand.vmem [shape: f32[3,128], index: 2, kind: input, shape index: {}]
  %s3 = inlined_call_operand.hbm [shape: f32[32,128], index: 3, kind: output, shape index: {}]
  %s4 = sld [smem:[#allocation0]]
  $region22: #{tpu_custom_call.1} parent=0
    _
  %s6 = ssub.s32 1, %s4
  %s7 = scalar_select 0, %s6, %s4
  $region1: #{tpu_custom_call.1} parent=0
    #allocation2 [shape = 'u8[16384]{0}', space=vmem, size = 0x4000, scoped, tag = 'output window, operand 0, single buffered']
    #allocation3 [shape = 's32[1]{0}', space=sflag, size = 0x4, scoped, tag = 'scoped memory for tpu_custom_call.1']
    %8 = vsyncpa [#allocation3], 0
    // Predicated region
    $region2: #{tpu_custom_call.1} parent=1 // pred_check
      _
    $region3: #{tpu_custom_call.1} parent=1 // pred_check_branch
      %10 = sbr.rel (0) target = $region5
    $region4: #{tpu_custom_call.1} parent=1 // pred_region
      _
    $region5: #{tpu_custom_call.1} parent=1 // pred_fallthru
      _
    // Predicated region
    $region6: #{tpu_custom_call.1} parent=1 // pred_check
      _
    $region7: #{tpu_custom_call.1} parent=1 // pred_check_branch
      %12 = sbr.rel (0) target = $region9
    $region8: #{tpu_custom_call.1} parent=1 // pred_region
      _
    $region9: #{tpu_custom_call.1} parent=1 // pred_fallthru
      _
    // Predicated region
    $region10: #{tpu_custom_call.1} parent=1 // pred_check
      _
    $region11: #{tpu_custom_call.1} parent=1 // pred_check_branch
      %14 = sbr.rel (0) target = $region13
    $region12: #{tpu_custom_call.1} parent=1 // pred_region
      _
    $region13: #{tpu_custom_call.1} parent=1 // pred_fallthru
      _
    %v15 = vld [vmem:[%s0] sm:$0xff]
    %v16 = vld [vmem:[%s0 + $0x8] sm:$0xff]
    %v17 = vld [vmem:[%s0 + $0x10] sm:$0xff]
    %v18 = vld [vmem:[%s0 + $0x18] sm:$0xff]
    %vm19 = vcmp.lt.f32.partialorder %v15, 0.0
    %vm20 = vcmp.lt.f32.partialorder %v16, 0.0
    %vm21 = vcmp.lt.f32.partialorder %v17, 0.0
    %vm22 = vcmp.lt.f32.partialorder %v18, 0.0
    %v23 = vceil.f32 %v15
    %v24 = vceil.f32 %v16
    %v25 = vceil.f32 %v17
    %v26 = vceil.f32 %v18
    %v27 = vfloor.f32 %v15
    %v28 = vfloor.f32 %v16
    %v29 = vfloor.f32 %v17
    %v30 = vfloor.f32 %v18
    %v31 = vsel %vm19, %v23, %v27
    %v32 = vsel %vm20, %v24, %v28
    %v33 = vsel %vm21, %v25, %v29
    %v34 = vsel %vm22, %v26, %v30
    %v35 = vld [vmem:[%s1] sm:$0xf]
    %vm36 = vcmask 31744
    %v38 = vsel %vm36, %v31, 0
    %v41 = vsel %vm36, %v32, 0
    %v44 = vsel %vm36, %v33, 0
    %v47 = vsel %vm36, %v34, 0
    %vm49 = vcmask 1043456
    %v51 = vsel %vm49, %v35, 0
    %53 = vmatpush.msra.mxu0 0.0
    %54 = vmatpush.msra.mxu0 0.0
    %55 = vmatpush.msra.mxu0 0.0
    %56 = vmatpush.msra.mxu0 0.0
    %57 = vmatpush.msra.mxu0 0.0
    %58 = vmatpush.msra.mxu0 0.0
    %59 = vmatpush.msra.mxu0 0.0
    %60 = vmatpush.msra.mxu0 0.0
    %61 = vmatpush.msra.mxu0 0.0
    %62 = vmatpush.msra.mxu0 0.0
    %63 = vmatpush.msra.mxu0 0.0
    %64 = vmatpush.msra.mxu0 0.0
    %65 = vmatpush.msra.mxu0 0.0
    %66 = vmatpush.msra.mxu0 0.0
    %67 = vmatpush.msra.mxu0 0.0
    %v68 = vand.u32 %v51, 4294901760
    %69 = vmatpush.msra.mxu0 %v68
    %v70 = vand.u32 %v38, 4294901760
    %v71 = vsub.f32 %v38, %v70
    %v72 = vand.u32 %v71, 4294901760
    %v73 = vsub.f32 %v71, %v72
    %v74 = vand.u32 %v73, 4294901760
    %75 = vmatmul.f32.gmra.mxu0 %v74
    %v76 = vpop.f32.mrf.mxu0
    %v77 = vadd.f32 0.0, %v76
    %v78 = vand.u32 %v41, 4294901760
    %v79 = vsub.f32 %v41, %v78
    %v80 = vand.u32 %v79, 4294901760
    %v81 = vsub.f32 %v79, %v80
    %v82 = vand.u32 %v81, 4294901760
    %83 = vmatmul.f32.gmra.mxu0 %v82
    %v84 = vpop.f32.mrf.mxu0
    %v85 = vadd.f32 0.0, %v84
    %v86 = vand.u32 %v44, 4294901760
    %v87 = vsub.f32 %v44, %v86
    %v88 = vand.u32 %v87, 4294901760
    %v89 = vsub.f32 %v87, %v88
    %v90 = vand.u32 %v89, 4294901760
    %91 = vmatmul.f32.gmra.mxu0 %v90
    %v92 = vpop.f32.mrf.mxu0
    %v93 = vadd.f32 0.0, %v92
    %v94 = vand.u32 %v47, 4294901760
    %v95 = vsub.f32 %v47, %v94
    %v96 = vand.u32 %v95, 4294901760
    %v97 = vsub.f32 %v95, %v96
    %v98 = vand.u32 %v97, 4294901760
    %99 = vmatmul.f32.gmra.mxu0 %v98
    %v100 = vpop.f32.mrf.mxu0
    %v101 = vadd.f32 0.0, %v100
    %102 = vdwg.mxu0
    %103 = vmatpush.msra.mxu0 0.0
    %104 = vmatpush.msra.mxu0 0.0
    %105 = vmatpush.msra.mxu0 0.0
    %106 = vmatpush.msra.mxu0 0.0
    %107 = vmatpush.msra.mxu0 0.0
    %108 = vmatpush.msra.mxu0 0.0
    %109 = vmatpush.msra.mxu0 0.0
    %110 = vmatpush.msra.mxu0 0.0
    %111 = vmatpush.msra.mxu0 0.0
    %112 = vmatpush.msra.mxu0 0.0
    %113 = vmatpush.msra.mxu0 0.0
    %114 = vmatpush.msra.mxu0 0.0
    %115 = vmatpush.msra.mxu0 0.0
    %116 = vmatpush.msra.mxu0 0.0
    %117 = vmatpush.msra.mxu0 0.0
    %v118 = vand.u32 %v51, 4294901760
    %v119 = vsub.f32 %v51, %v118
    %v120 = vand.u32 %v119, 4294901760
    %v121 = vsub.f32 %v119, %v120
    %v122 = vand.u32 %v121, 4294901760
    %123 = vmatpush.msra.mxu0 %v122
    %v124 = vand.u32 %v38, 4294901760
    %125 = vmatmul.f32.gmra.mxu0 %v124
    %v126 = vpop.f32.mrf.mxu0
    %v127 = vadd.f32 %v77, %v126
    %v128 = vand.u32 %v41, 4294901760
    %129 = vmatmul.f32.gmra.mxu0 %v128
    %v130 = vpop.f32.mrf.mxu0
    %v131 = vadd.f32 %v85, %v130
    %v132 = vand.u32 %v44, 4294901760
    %133 = vmatmul.f32.gmra.mxu0 %v132
    %v134 = vpop.f32.mrf.mxu0
    %v135 = vadd.f32 %v93, %v134
    %v136 = vand.u32 %v47, 4294901760
    %137 = vmatmul.f32.gmra.mxu0 %v136
    %v138 = vpop.f32.mrf.mxu0
    %v139 = vadd.f32 %v101, %v138
    %140 = vdwg.mxu0
    %141 = vmatpush.msra.mxu0 0.0
    %142 = vmatpush.msra.mxu0 0.0
    %143 = vmatpush.msra.mxu0 0.0
    %144 = vmatpush.msra.mxu0 0.0
    %145 = vmatpush.msra.mxu0 0.0
    %146 = vmatpush.msra.mxu0 0.0
    %147 = vmatpush.msra.mxu0 0.0
    %148 = vmatpush.msra.mxu0 0.0
    %149 = vmatpush.msra.mxu0 0.0
    %150 = vmatpush.msra.mxu0 0.0
    %151 = vmatpush.msra.mxu0 0.0
    %152 = vmatpush.msra.mxu0 0.0
    %153 = vmatpush.msra.mxu0 0.0
    %154 = vmatpush.msra.mxu0 0.0
    %155 = vmatpush.msra.mxu0 0.0
    %v156 = vand.u32 %v51, 4294901760
    %v157 = vsub.f32 %v51, %v156
    %158 = vmatpush.msra.mxu0 %v157
    %v159 = vand.u32 %v38, 4294901760
    %v160 = vsub.f32 %v38, %v159
    %161 = vmatmul.f32.gmra.mxu0 %v160
    %v162 = vpop.f32.mrf.mxu0
    %v163 = vadd.f32 %v127, %v162
    %v164 = vand.u32 %v41, 4294901760
    %v165 = vsub.f32 %v41, %v164
    %166 = vmatmul.f32.gmra.mxu0 %v165
    %v167 = vpop.f32.mrf.mxu0
    %v168 = vadd.f32 %v131, %v167
    %v169 = vand.u32 %v44, 4294901760
    %v170 = vsub.f32 %v44, %v169
    %171 = vmatmul.f32.gmra.mxu0 %v170
    %v172 = vpop.f32.mrf.mxu0
    %v173 = vadd.f32 %v135, %v172
    %v174 = vand.u32 %v47, 4294901760
    %v175 = vsub.f32 %v47, %v174
    %176 = vmatmul.f32.gmra.mxu0 %v175
    %v177 = vpop.f32.mrf.mxu0
    %v178 = vadd.f32 %v139, %v177
    %179 = vdwg.mxu0
    %180 = vmatpush.msra.mxu0 0.0
    %181 = vmatpush.msra.mxu0 0.0
    %182 = vmatpush.msra.mxu0 0.0
    %183 = vmatpush.msra.mxu0 0.0
    %184 = vmatpush.msra.mxu0 0.0
    %185 = vmatpush.msra.mxu0 0.0
    %186 = vmatpush.msra.mxu0 0.0
    %187 = vmatpush.msra.mxu0 0.0
    %188 = vmatpush.msra.mxu0 0.0
    %189 = vmatpush.msra.mxu0 0.0
    %190 = vmatpush.msra.mxu0 0.0
    %191 = vmatpush.msra.mxu0 0.0
    %192 = vmatpush.msra.mxu0 0.0
    %193 = vmatpush.msra.mxu0 0.0
    %194 = vmatpush.msra.mxu0 0.0
    %v195 = vand.u32 %v51, 4294901760
    %196 = vmatpush.msra.mxu0 %v195
    %v197 = vand.u32 %v38, 4294901760
    %v198 = vsub.f32 %v38, %v197
    %v199 = vand.u32 %v198, 4294901760
    %200 = vmatmul.f32.gmra.mxu0 %v199
    %v201 = vpop.f32.mrf.mxu0
    %v202 = vadd.f32 %v163, %v201
    %v203 = vand.u32 %v41, 4294901760
    %v204 = vsub.f32 %v41, %v203
    %v205 = vand.u32 %v204, 4294901760
    %206 = vmatmul.f32.gmra.mxu0 %v205
    %v207 = vpop.f32.mrf.mxu0
    %v208 = vadd.f32 %v168, %v207
    %v209 = vand.u32 %v44, 4294901760
    %v210 = vsub.f32 %v44, %v209
    %v211 = vand.u32 %v210, 4294901760
    %212 = vmatmul.f32.gmra.mxu0 %v211
    %v213 = vpop.f32.mrf.mxu0
    %v214 = vadd.f32 %v173, %v213
    %v215 = vand.u32 %v47, 4294901760
    %v216 = vsub.f32 %v47, %v215
    %v217 = vand.u32 %v216, 4294901760
    %218 = vmatmul.f32.gmra.mxu0 %v217
    %v219 = vpop.f32.mrf.mxu0
    %v220 = vadd.f32 %v178, %v219
    %221 = vdwg.mxu0
    %222 = vmatpush.msra.mxu0 0.0
    %223 = vmatpush.msra.mxu0 0.0
    %224 = vmatpush.msra.mxu0 0.0
    %225 = vmatpush.msra.mxu0 0.0
    %226 = vmatpush.msra.mxu0 0.0
    %227 = vmatpush.msra.mxu0 0.0
    %228 = vmatpush.msra.mxu0 0.0
    %229 = vmatpush.msra.mxu0 0.0
    %230 = vmatpush.msra.mxu0 0.0
    %231 = vmatpush.msra.mxu0 0.0
    %232 = vmatpush.msra.mxu0 0.0
    %233 = vmatpush.msra.mxu0 0.0
    %234 = vmatpush.msra.mxu0 0.0
    %235 = vmatpush.msra.mxu0 0.0
    %236 = vmatpush.msra.mxu0 0.0
    %v237 = vand.u32 %v51, 4294901760
    %v238 = vsub.f32 %v51, %v237
    %v239 = vand.u32 %v238, 4294901760
    %240 = vmatpush.msra.mxu0 %v239
    %v241 = vand.u32 %v38, 4294901760
    %242 = vmatmul.f32.gmra.mxu0 %v241
    %v243 = vpop.f32.mrf.mxu0
    %v244 = vadd.f32 %v202, %v243
    %v245 = vand.u32 %v41, 4294901760
    %246 = vmatmul.f32.gmra.mxu0 %v245
    %v247 = vpop.f32.mrf.mxu0
    %v248 = vadd.f32 %v208, %v247
    %v249 = vand.u32 %v44, 4294901760
    %250 = vmatmul.f32.gmra.mxu0 %v249
    %v251 = vpop.f32.mrf.mxu0
    %v252 = vadd.f32 %v214, %v251
    %v253 = vand.u32 %v47, 4294901760
    %254 = vmatmul.f32.gmra.mxu0 %v253
    %v255 = vpop.f32.mrf.mxu0
    %v256 = vadd.f32 %v220, %v255
    %257 = vdwg.mxu0
    %258 = vmatpush.msra.mxu0 0.0
    %259 = vmatpush.msra.mxu0 0.0
    %260 = vmatpush.msra.mxu0 0.0
    %261 = vmatpush.msra.mxu0 0.0
    %262 = vmatpush.msra.mxu0 0.0
    %263 = vmatpush.msra.mxu0 0.0
    %264 = vmatpush.msra.mxu0 0.0
    %265 = vmatpush.msra.mxu0 0.0
    %266 = vmatpush.msra.mxu0 0.0
    %267 = vmatpush.msra.mxu0 0.0
    %268 = vmatpush.msra.mxu0 0.0
    %269 = vmatpush.msra.mxu0 0.0
    %270 = vmatpush.msra.mxu0 0.0
    %271 = vmatpush.msra.mxu0 0.0
    %272 = vmatpush.msra.mxu0 0.0
    %v273 = vand.u32 %v51, 4294901760
    %274 = vmatpush.msra.mxu0 %v273
    %v275 = vand.u32 %v38, 4294901760
    %276 = vmatmul.f32.gmra.mxu0 %v275
    %v277 = vpop.f32.mrf.mxu0
    %v278 = vadd.f32 %v244, %v277
    %v279 = vand.u32 %v41, 4294901760
    %280 = vmatmul.f32.gmra.mxu0 %v279
    %v281 = vpop.f32.mrf.mxu0
    %v282 = vadd.f32 %v248, %v281
    %v283 = vand.u32 %v44, 4294901760
    %284 = vmatmul.f32.gmra.mxu0 %v283
    %v285 = vpop.f32.mrf.mxu0
    %v286 = vadd.f32 %v252, %v285
    %v287 = vand.u32 %v47, 4294901760
    %288 = vmatmul.f32.gmra.mxu0 %v287
    %v289 = vpop.f32.mrf.mxu0
    %v290 = vadd.f32 %v256, %v289
    %291 = vdwg.mxu0
    %v292 = vld [vmem:[%s2] sm:$0x1]
    %v293 = vld [vmem:[%s2 + $0x1] sm:$0x1]
    %v294 = vld [vmem:[%s2 + $0x2] sm:$0x1]
    %v295 = vperm.slane %v292, 0
    %v296 = vmul.f32 %v278, %v295
    %v297 = vmul.f32 %v282, %v295
    %v298 = vmul.f32 %v286, %v295
    %v299 = vmul.f32 %v290, %v295
    %v300 = vperm.slane %v293, 0
    %v301 = vadd.f32 %v296, %v300
    %v302 = vadd.f32 %v297, %v300
    %v303 = vadd.f32 %v298, %v300
    %v304 = vadd.f32 %v299, %v300
    %vm305 = vcmp.ne.f32.partialorder %v294, 0.0
    %v306 = vand.u32 2147483647, %v301
    %vm307 = vcmp.le.f32.partialorder %v306, 0.7853982
    %vm308 = vcmp.lt.s32.totalorder %v301, 0
    %v309 = vand.u32 %v301, 2139095040
    %v310 = vshrl.u32 %v309, 23
    %v311 = vsub.s32 %v310, 127
    %v312 = vand.u32 2147483647, %v301
    %v313 = vand.u32 %v312, 8388607
    %v314 = vor.u32 %v313, 8388608
    %v315 = vsub.s32 0, %v314
    %v316 = vadd.s32 %v311, 1
    %vm317 = vcmp.gt.s32.totalorder %v316, 0
    %v318 = vsel %vm317, %v316, 0
    %v319 = vshrl.u32 %v318, 5
    %v320 = vand.u32 %v318, 31
    %v321 = vsub.s32 32, %v320
    %v322 = vshrl.u32 683565275, %v321
    %v323 = vshll.u32 683565275, %v320
    %v324 = vshrl.u32 2475754826, %v321
    %v325 = vor.u32 %v323, %v324
    %v326 = vshll.u32 2475754826, %v320
    %v327 = vshrl.u32 2131351028, %v321
    %v328 = vor.u32 %v326, %v327
    %v329 = vshll.u32 2131351028, %v320
    %v330 = vshrl.u32 2102212464, %v321
    %v331 = vor.u32 %v329, %v330
    %v332 = vshll.u32 2102212464, %v320
    %v333 = vshrl.u32 920167782, %v321
    %v334 = vor.u32 %v332, %v333
    %v335 = vshll.u32 920167782, %v320
    %v336 = vshrl.u32 1326507024, %v321
    %v337 = vor.u32 %v335, %v336
    %vm338 = vcmp.lt.s32.totalorder %v319, 1
    %vm339 = vcmp.lt.s32.totalorder %v319, 2
    %vm340 = vcmp.lt.s32.totalorder %v319, 3
    %vm341 = vcmp.lt.s32.totalorder %v319, 4
    %v342 = vsel %vm338, %v322, %v325
    %v343 = vsel %vm341, %v331, 2102212464
    %v344 = vsel %vm340, %v328, %v343
    %v345 = vsel %vm339, %v342, %v344
    %v346 = vsel %vm338, %v325, %v328
    %v347 = vsel %vm341, %v334, 920167782
    %v348 = vsel %vm340, %v331, %v347
    %v349 = vsel %vm339, %v346, %v348
    %v350 = vsel %vm338, %v328, %v331
    %v351 = vsel %vm341, %v337, 1326507024
    %v352 = vsel %vm340, %v334, %v351
    %v353 = vsel %vm339, %v350, %v352
    %v354 = vshll.u32 %v314, 8
    %v355 = vand.u32 %v354, 65535
    %v356 = vshrl.u32 %v354, 16
    %v357 = vand.u32 %v353, 65535
    %v358 = vshrl.u32 %v353, 16
    %v359 = vmul.u32 %v355, %v357
    %v360 = vmul.u32 %v355, %v358
    %v361 = vmul.u32 %v356, %v357
    %v362 = vmul.u32 %v356, %v358
    %v363 = vshll.u32 %v360, 16
    %v364 = vshrl.u32 %v360, 16
    %v365 = vshll.u32 %v361, 16
    %v366 = vshrl.u32 %v361, 16
    %vm367 = vc.u32 %v359, %v363
    %v368 = vsel %vm367, 1, 0
    %v369 = vadd.s32 %v359, %v363
    %v370 = vadd.s32 %v362, %v368
    %vm371 = vc.u32 %v369, %v365
    %v372 = vsel %vm371, 1, 0
    %v373 = vadd.s32 %v369, %v365
    %v374 = vadd.s32 %v370, %v372
    %v375 = vadd.s32 %v374, %v364
    %v376 = vadd.s32 %v375, %v366
    %v377 = vand.u32 %v354, 65535
    %v378 = vshrl.u32 %v354, 16
    %v379 = vand.u32 %v349, 65535
    %v380 = vshrl.u32 %v349, 16
    %v381 = vmul.u32 %v377, %v379
    %v382 = vmul.u32 %v377, %v380
    %v383 = vmul.u32 %v378, %v379
    %v384 = vmul.u32 %v378, %v380
    %v385 = vshll.u32 %v382, 16
    %v386 = vshrl.u32 %v382, 16
    %v387 = vshll.u32 %v383, 16
    %v388 = vshrl.u32 %v383, 16
    %vm389 = vc.u32 %v381, %v385
    %v390 = vsel %vm389, 1, 0
    %v391 = vadd.s32 %v381, %v385
    %v392 = vadd.s32 %v384, %v390
    %vm393 = vc.u32 %v391, %v387
    %v394 = vsel %vm393, 1, 0
    %v395 = vadd.s32 %v391, %v387
    %v396 = vadd.s32 %v392, %v394
    %v397 = vadd.s32 %v396, %v386
    %v398 = vadd.s32 %v397, %v388
    %v399 = vmul.u32 %v354, %v345
    %v400 = vadd.s32 %v376, %v395
    %vm401 = vc.u32 %v376, %v395
    %v402 = vadd.s32 %v398, 1
    %v403 = vsel %vm401, %v402, %v398
    %v404 = vadd.s32 %v399, %v403
    %v405 = vadd.s32 %v404, 536870912
    %v406 = vshrl.u32 %v405, 30
    %v407 = vshll.u32 %v406, 30
    %v408 = vsub.s32 %v404, %v407
    %vm409 = vcmp.lt.s32.totalorder %v408, 0
    %v410 = vsub.s32 0, %v408
    %v411 = vsel %vm409, %v410, %v408
    %v412 = vclz %v411
    %v413 = vsub.s32 %v412, 2
    %vm414 = vcmp.gt.s32.totalorder 0, %v413
    %v415 = vsel %vm414, 0, %v413
    %v416 = vsub.s32 32, %v415
    %v417 = vshll.u32 %v408, %v415
    %v418 = vshrl.u32 %v400, %v416
    %v419 = vor.u32 %v417, %v418
    %v420 = vsub.s32 4294967266, %v415
    %v421 = vadd.s32 %v420, 127
    %v422 = vshll.u32 %v421, 23
    %v423 = vor.u32 4788187, %v422
    %v424 = vand.u32 2147483647, %v423
    %v426 = vcvt.s32.f32 %v419
    %v427 = vmul.f32 %v426, %v424
    %v428 = vxor.u32 %v427, 2147483648
    %v429 = vsel %vm308, %v428, %v427
    %v430 = vsub.s32 4, %v406
    %v431 = vsel %vm308, %v430, %v406
    %v432 = vsel %vm307, %v301, %v429
    %v433 = vsel %vm307, 0, %v431
    %v434 = vmul.f32 %v432, %v432
    %v435 = vmul.f32 %v434, -0.001358992
    %v436 = vadd.f32 %v435, 0.041655596
    %v437 = vmul.f32 %v434, %v436
    %v438 = vadd.f32 %v437, -0.4999988
    %v439 = vmul.f32 %v434, %v438
    %v440 = vadd.f32 1.0, %v439
    %v441 = vmul.f32 %v432, %v432
    %v442 = vmul.f32 %v441, -0.00019511016
    %v443 = vadd.f32 %v442, 0.008332121
    %v444 = vmul.f32 %v441, %v443
    %v445 = vadd.f32 %v444, -0.16666654
    %v446 = vmul.f32 %v441, %v445
    %v447 = vadd.f32 %v446, 1.0
    %v448 = vmul.f32 %v447, %v432
    %vm449 = vweird.f32 %v301
    %v450 = vadd.s32 %v433, 3
    %v451 = vand.u32 %v450, 3
    %vm452 = vcmp.lt.s32.totalorder %v451, 2
    %vm453 = vcmp.eq.s32.totalorder %v451, 0
    %v454 = vxor.u32 %v448, 2147483648
    %v455 = vsel %vm453, %v440, %v454
    %vm456 = vcmp.eq.s32.totalorder %v451, 2
    %v457 = vxor.u32 %v440, 2147483648
    %v458 = vsel %vm456, %v457, %v448
    %v459 = vsel %vm452, %v455, %v458
    %v460 = vsel %vm449, nan, %v459
    %v461 = vand.u32 2147483647, %v302
    %vm462 = vcmp.le.f32.partialorder %v461, 0.7853982
    %vm463 = vcmp.lt.s32.totalorder %v302, 0
    %v464 = vand.u32 %v302, 2139095040
    %v465 = vshrl.u32 %v464, 23
    %v466 = vsub.s32 %v465, 127
    %v467 = vand.u32 2147483647, %v302
    %v468 = vand.u32 %v467, 8388607
    %v469 = vor.u32 %v468, 8388608
    %v470 = vsub.s32 0, %v469
    %v471 = vadd.s32 %v466, 1
    %vm472 = vcmp.gt.s32.totalorder %v471, 0
    %v473 = vsel %vm472, %v471, 0
    %v474 = vshrl.u32 %v473, 5
    %v475 = vand.u32 %v473, 31
    %v476 = vsub.s32 32, %v475
    %v477 = vshrl.u32 683565275, %v476
    %v478 = vshll.u32 683565275, %v475
    %v479 = vshrl.u32 2475754826, %v476
    %v480 = vor.u32 %v478, %v479
    %v481 = vshll.u32 2475754826, %v475
    %v482 = vshrl.u32 2131351028, %v476
    %v483 = vor.u32 %v481, %v482
    %v484 = vshll.u32 2131351028, %v475
    %v485 = vshrl.u32 2102212464, %v476
    %v486 = vor.u32 %v484, %v485
    %v487 = vshll.u32 2102212464, %v475
    %v488 = vshrl.u32 920167782, %v476
    %v489 = vor.u32 %v487, %v488
    %v490 = vshll.u32 920167782, %v475
    %v491 = vshrl.u32 1326507024, %v476
    %v492 = vor.u32 %v490, %v491
    %vm493 = vcmp.lt.s32.totalorder %v474, 1
    %vm494 = vcmp.lt.s32.totalorder %v474, 2
    %vm495 = vcmp.lt.s32.totalorder %v474, 3
    %vm496 = vcmp.lt.s32.totalorder %v474, 4
    %v497 = vsel %vm493, %v477, %v480
    %v498 = vsel %vm496, %v486, 2102212464
    %v499 = vsel %vm495, %v483, %v498
    %v500 = vsel %vm494, %v497, %v499
    %v501 = vsel %vm493, %v480, %v483
    %v502 = vsel %vm496, %v489, 920167782
    %v503 = vsel %vm495, %v486, %v502
    %v504 = vsel %vm494, %v501, %v503
    %v505 = vsel %vm493, %v483, %v486
    %v506 = vsel %vm496, %v492, 1326507024
    %v507 = vsel %vm495, %v489, %v506
    %v508 = vsel %vm494, %v505, %v507
    %v509 = vshll.u32 %v469, 8
    %v510 = vand.u32 %v509, 65535
    %v511 = vshrl.u32 %v509, 16
    %v512 = vand.u32 %v508, 65535
    %v513 = vshrl.u32 %v508, 16
    %v514 = vmul.u32 %v510, %v512
    %v515 = vmul.u32 %v510, %v513
    %v516 = vmul.u32 %v511, %v512
    %v517 = vmul.u32 %v511, %v513
    %v518 = vshll.u32 %v515, 16
    %v519 = vshrl.u32 %v515, 16
    %v520 = vshll.u32 %v516, 16
    %v521 = vshrl.u32 %v516, 16
    %vm522 = vc.u32 %v514, %v518
    %v523 = vsel %vm522, 1, 0
    %v524 = vadd.s32 %v514, %v518
    %v525 = vadd.s32 %v517, %v523
    %vm526 = vc.u32 %v524, %v520
    %v527 = vsel %vm526, 1, 0
    %v528 = vadd.s32 %v524, %v520
    %v529 = vadd.s32 %v525, %v527
    %v530 = vadd.s32 %v529, %v519
    %v531 = vadd.s32 %v530, %v521
    %v532 = vand.u32 %v509, 65535
    %v533 = vshrl.u32 %v509, 16
    %v534 = vand.u32 %v504, 65535
    %v535 = vshrl.u32 %v504, 16
    %v536 = vmul.u32 %v532, %v534
    %v537 = vmul.u32 %v532, %v535
    %v538 = vmul.u32 %v533, %v534
    %v539 = vmul.u32 %v533, %v535
    %v540 = vshll.u32 %v537, 16
    %v541 = vshrl.u32 %v537, 16
    %v542 = vshll.u32 %v538, 16
    %v543 = vshrl.u32 %v538, 16
    %vm544 = vc.u32 %v536, %v540
    %v545 = vsel %vm544, 1, 0
    %v546 = vadd.s32 %v536, %v540
    %v547 = vadd.s32 %v539, %v545
    %vm548 = vc.u32 %v546, %v542
    %v549 = vsel %vm548, 1, 0
    %v550 = vadd.s32 %v546, %v542
    %v551 = vadd.s32 %v547, %v549
    %v552 = vadd.s32 %v551, %v541
    %v553 = vadd.s32 %v552, %v543
    %v554 = vmul.u32 %v509, %v500
    %v555 = vadd.s32 %v531, %v550
    %vm556 = vc.u32 %v531, %v550
    %v557 = vadd.s32 %v553, 1
    %v558 = vsel %vm556, %v557, %v553
    %v559 = vadd.s32 %v554, %v558
    %v560 = vadd.s32 %v559, 536870912
    %v561 = vshrl.u32 %v560, 30
    %v562 = vshll.u32 %v561, 30
    %v563 = vsub.s32 %v559, %v562
    %vm564 = vcmp.lt.s32.totalorder %v563, 0
    %v565 = vsub.s32 0, %v563
    %v566 = vsel %vm564, %v565, %v563
    %v567 = vclz %v566
    %v568 = vsub.s32 %v567, 2
    %vm569 = vcmp.gt.s32.totalorder 0, %v568
    %v570 = vsel %vm569, 0, %v568
    %v571 = vsub.s32 32, %v570
    %v572 = vshll.u32 %v563, %v570
    %v573 = vshrl.u32 %v555, %v571
    %v574 = vor.u32 %v572, %v573
    %v575 = vsub.s32 4294967266, %v570
    %v576 = vadd.s32 %v575, 127
    %v577 = vshll.u32 %v576, 23
    %v578 = vor.u32 4788187, %v577
    %v579 = vand.u32 2147483647, %v578
    %v581 = vcvt.s32.f32 %v574
    %v582 = vmul.f32 %v581, %v579
    %v583 = vxor.u32 %v582, 2147483648
    %v584 = vsel %vm463, %v583, %v582
    %v585 = vsub.s32 4, %v561
    %v586 = vsel %vm463, %v585, %v561
    %v587 = vsel %vm462, %v302, %v584
    %v588 = vsel %vm462, 0, %v586
    %v589 = vmul.f32 %v587, %v587
    %v590 = vmul.f32 %v589, -0.001358992
    %v591 = vadd.f32 %v590, 0.041655596
    %v592 = vmul.f32 %v589, %v591
    %v593 = vadd.f32 %v592, -0.4999988
    %v594 = vmul.f32 %v589, %v593
    %v595 = vadd.f32 1.0, %v594
    %v596 = vmul.f32 %v587, %v587
    %v597 = vmul.f32 %v596, -0.00019511016
    %v598 = vadd.f32 %v597, 0.008332121
    %v599 = vmul.f32 %v596, %v598
    %v600 = vadd.f32 %v599, -0.16666654
    %v601 = vmul.f32 %v596, %v600
    %v602 = vadd.f32 %v601, 1.0
    %v603 = vmul.f32 %v602, %v587
    %vm604 = vweird.f32 %v302
    %v605 = vadd.s32 %v588, 3
    %v606 = vand.u32 %v605, 3
    %vm607 = vcmp.lt.s32.totalorder %v606, 2
    %vm608 = vcmp.eq.s32.totalorder %v606, 0
    %v609 = vxor.u32 %v603, 2147483648
    %v610 = vsel %vm608, %v595, %v609
    %vm611 = vcmp.eq.s32.totalorder %v606, 2
    %v612 = vxor.u32 %v595, 2147483648
    %v613 = vsel %vm611, %v612, %v603
    %v614 = vsel %vm607, %v610, %v613
    %v615 = vsel %vm604, nan, %v614
    %v616 = vand.u32 2147483647, %v303
    %vm617 = vcmp.le.f32.partialorder %v616, 0.7853982
    %vm618 = vcmp.lt.s32.totalorder %v303, 0
    %v619 = vand.u32 %v303, 2139095040
    %v620 = vshrl.u32 %v619, 23
    %v621 = vsub.s32 %v620, 127
    %v622 = vand.u32 2147483647, %v303
    %v623 = vand.u32 %v622, 8388607
    %v624 = vor.u32 %v623, 8388608
    %v625 = vsub.s32 0, %v624
    %v626 = vadd.s32 %v621, 1
    %vm627 = vcmp.gt.s32.totalorder %v626, 0
    %v628 = vsel %vm627, %v626, 0
    %v629 = vshrl.u32 %v628, 5
    %v630 = vand.u32 %v628, 31
    %v631 = vsub.s32 32, %v630
    %v632 = vshrl.u32 683565275, %v631
    %v633 = vshll.u32 683565275, %v630
    %v634 = vshrl.u32 2475754826, %v631
    %v635 = vor.u32 %v633, %v634
    %v636 = vshll.u32 2475754826, %v630
    %v637 = vshrl.u32 2131351028, %v631
    %v638 = vor.u32 %v636, %v637
    %v639 = vshll.u32 2131351028, %v630
    %v640 = vshrl.u32 2102212464, %v631
    %v641 = vor.u32 %v639, %v640
    %v642 = vshll.u32 2102212464, %v630
    %v643 = vshrl.u32 920167782, %v631
    %v644 = vor.u32 %v642, %v643
    %v645 = vshll.u32 920167782, %v630
    %v646 = vshrl.u32 1326507024, %v631
    %v647 = vor.u32 %v645, %v646
    %vm648 = vcmp.lt.s32.totalorder %v629, 1
    %vm649 = vcmp.lt.s32.totalorder %v629, 2
    %vm650 = vcmp.lt.s32.totalorder %v629, 3
    %vm651 = vcmp.lt.s32.totalorder %v629, 4
    %v652 = vsel %vm648, %v632, %v635
    %v653 = vsel %vm651, %v641, 2102212464
    %v654 = vsel %vm650, %v638, %v653
    %v655 = vsel %vm649, %v652, %v654
    %v656 = vsel %vm648, %v635, %v638
    %v657 = vsel %vm651, %v644, 920167782
    %v658 = vsel %vm650, %v641, %v657
    %v659 = vsel %vm649, %v656, %v658
    %v660 = vsel %vm648, %v638, %v641
    %v661 = vsel %vm651, %v647, 1326507024
    %v662 = vsel %vm650, %v644, %v661
    %v663 = vsel %vm649, %v660, %v662
    %v664 = vshll.u32 %v624, 8
    %v665 = vand.u32 %v664, 65535
    %v666 = vshrl.u32 %v664, 16
    %v667 = vand.u32 %v663, 65535
    %v668 = vshrl.u32 %v663, 16
    %v669 = vmul.u32 %v665, %v667
    %v670 = vmul.u32 %v665, %v668
    %v671 = vmul.u32 %v666, %v667
    %v672 = vmul.u32 %v666, %v668
    %v673 = vshll.u32 %v670, 16
    %v674 = vshrl.u32 %v670, 16
    %v675 = vshll.u32 %v671, 16
    %v676 = vshrl.u32 %v671, 16
    %vm677 = vc.u32 %v669, %v673
    %v678 = vsel %vm677, 1, 0
    %v679 = vadd.s32 %v669, %v673
    %v680 = vadd.s32 %v672, %v678
    %vm681 = vc.u32 %v679, %v675
    %v682 = vsel %vm681, 1, 0
    %v683 = vadd.s32 %v679, %v675
    %v684 = vadd.s32 %v680, %v682
    %v685 = vadd.s32 %v684, %v674
    %v686 = vadd.s32 %v685, %v676
    %v687 = vand.u32 %v664, 65535
    %v688 = vshrl.u32 %v664, 16
    %v689 = vand.u32 %v659, 65535
    %v690 = vshrl.u32 %v659, 16
    %v691 = vmul.u32 %v687, %v689
    %v692 = vmul.u32 %v687, %v690
    %v693 = vmul.u32 %v688, %v689
    %v694 = vmul.u32 %v688, %v690
    %v695 = vshll.u32 %v692, 16
    %v696 = vshrl.u32 %v692, 16
    %v697 = vshll.u32 %v693, 16
    %v698 = vshrl.u32 %v693, 16
    %vm699 = vc.u32 %v691, %v695
    %v700 = vsel %vm699, 1, 0
    %v701 = vadd.s32 %v691, %v695
    %v702 = vadd.s32 %v694, %v700
    %vm703 = vc.u32 %v701, %v697
    %v704 = vsel %vm703, 1, 0
    %v705 = vadd.s32 %v701, %v697
    %v706 = vadd.s32 %v702, %v704
    %v707 = vadd.s32 %v706, %v696
    %v708 = vadd.s32 %v707, %v698
    %v709 = vmul.u32 %v664, %v655
    %v710 = vadd.s32 %v686, %v705
    %vm711 = vc.u32 %v686, %v705
    %v712 = vadd.s32 %v708, 1
    %v713 = vsel %vm711, %v712, %v708
    %v714 = vadd.s32 %v709, %v713
    %v715 = vadd.s32 %v714, 536870912
    %v716 = vshrl.u32 %v715, 30
    %v717 = vshll.u32 %v716, 30
    %v718 = vsub.s32 %v714, %v717
    %vm719 = vcmp.lt.s32.totalorder %v718, 0
    %v720 = vsub.s32 0, %v718
    %v721 = vsel %vm719, %v720, %v718
    %v722 = vclz %v721
    %v723 = vsub.s32 %v722, 2
    %vm724 = vcmp.gt.s32.totalorder 0, %v723
    %v725 = vsel %vm724, 0, %v723
    %v726 = vsub.s32 32, %v725
    %v727 = vshll.u32 %v718, %v725
    %v728 = vshrl.u32 %v710, %v726
    %v729 = vor.u32 %v727, %v728
    %v730 = vsub.s32 4294967266, %v725
    %v731 = vadd.s32 %v730, 127
    %v732 = vshll.u32 %v731, 23
    %v733 = vor.u32 4788187, %v732
    %v734 = vand.u32 2147483647, %v733
    %v736 = vcvt.s32.f32 %v729
    %v737 = vmul.f32 %v736, %v734
    %v738 = vxor.u32 %v737, 2147483648
    %v739 = vsel %vm618, %v738, %v737
    %v740 = vsub.s32 4, %v716
    %v741 = vsel %vm618, %v740, %v716
    %v742 = vsel %vm617, %v303, %v739
    %v743 = vsel %vm617, 0, %v741
    %v744 = vmul.f32 %v742, %v742
    %v745 = vmul.f32 %v744, -0.001358992
    %v746 = vadd.f32 %v745, 0.041655596
    %v747 = vmul.f32 %v744, %v746
    %v748 = vadd.f32 %v747, -0.4999988
    %v749 = vmul.f32 %v744, %v748
    %v750 = vadd.f32 1.0, %v749
    %v751 = vmul.f32 %v742, %v742
    %v752 = vmul.f32 %v751, -0.00019511016
    %v753 = vadd.f32 %v752, 0.008332121
    %v754 = vmul.f32 %v751, %v753
    %v755 = vadd.f32 %v754, -0.16666654
    %v756 = vmul.f32 %v751, %v755
    %v757 = vadd.f32 %v756, 1.0
    %v758 = vmul.f32 %v757, %v742
    %vm759 = vweird.f32 %v303
    %v760 = vadd.s32 %v743, 3
    %v761 = vand.u32 %v760, 3
    %vm762 = vcmp.lt.s32.totalorder %v761, 2
    %vm763 = vcmp.eq.s32.totalorder %v761, 0
    %v764 = vxor.u32 %v758, 2147483648
    %v765 = vsel %vm763, %v750, %v764
    %vm766 = vcmp.eq.s32.totalorder %v761, 2
    %v767 = vxor.u32 %v750, 2147483648
    %v768 = vsel %vm766, %v767, %v758
    %v769 = vsel %vm762, %v765, %v768
    %v770 = vsel %vm759, nan, %v769
    %v771 = vand.u32 2147483647, %v304
    %vm772 = vcmp.le.f32.partialorder %v771, 0.7853982
    %vm773 = vcmp.lt.s32.totalorder %v304, 0
    %v774 = vand.u32 %v304, 2139095040
    %v775 = vshrl.u32 %v774, 23
    %v776 = vsub.s32 %v775, 127
    %v777 = vand.u32 2147483647, %v304
    %v778 = vand.u32 %v777, 8388607
    %v779 = vor.u32 %v778, 8388608
    %v780 = vsub.s32 0, %v779
    %v781 = vadd.s32 %v776, 1
    %vm782 = vcmp.gt.s32.totalorder %v781, 0
    %v783 = vsel %vm782, %v781, 0
    %v784 = vshrl.u32 %v783, 5
    %v785 = vand.u32 %v783, 31
    %v786 = vsub.s32 32, %v785
    %v787 = vshrl.u32 683565275, %v786
    %v788 = vshll.u32 683565275, %v785
    %v789 = vshrl.u32 2475754826, %v786
    %v790 = vor.u32 %v788, %v789
    %v791 = vshll.u32 2475754826, %v785
    %v792 = vshrl.u32 2131351028, %v786
    %v793 = vor.u32 %v791, %v792
    %v794 = vshll.u32 2131351028, %v785
    %v795 = vshrl.u32 2102212464, %v786
    %v796 = vor.u32 %v794, %v795
    %v797 = vshll.u32 2102212464, %v785
    %v798 = vshrl.u32 920167782, %v786
    %v799 = vor.u32 %v797, %v798
    %v800 = vshll.u32 920167782, %v785
    %v801 = vshrl.u32 1326507024, %v786
    %v802 = vor.u32 %v800, %v801
    %vm803 = vcmp.lt.s32.totalorder %v784, 1
    %vm804 = vcmp.lt.s32.totalorder %v784, 2
    %vm805 = vcmp.lt.s32.totalorder %v784, 3
    %vm806 = vcmp.lt.s32.totalorder %v784, 4
    %v807 = vsel %vm803, %v787, %v790
    %v808 = vsel %vm806, %v796, 2102212464
    %v809 = vsel %vm805, %v793, %v808
    %v810 = vsel %vm804, %v807, %v809
    %v811 = vsel %vm803, %v790, %v793
    %v812 = vsel %vm806, %v799, 920167782
    %v813 = vsel %vm805, %v796, %v812
    %v814 = vsel %vm804, %v811, %v813
    %v815 = vsel %vm803, %v793, %v796
    %v816 = vsel %vm806, %v802, 1326507024
    %v817 = vsel %vm805, %v799, %v816
    %v818 = vsel %vm804, %v815, %v817
    %v819 = vshll.u32 %v779, 8
    %v820 = vand.u32 %v819, 65535
    %v821 = vshrl.u32 %v819, 16
    %v822 = vand.u32 %v818, 65535
    %v823 = vshrl.u32 %v818, 16
    %v824 = vmul.u32 %v820, %v822
    %v825 = vmul.u32 %v820, %v823
    %v826 = vmul.u32 %v821, %v822
    %v827 = vmul.u32 %v821, %v823
    %v828 = vshll.u32 %v825, 16
    %v829 = vshrl.u32 %v825, 16
    %v830 = vshll.u32 %v826, 16
    %v831 = vshrl.u32 %v826, 16
    %vm832 = vc.u32 %v824, %v828
    %v833 = vsel %vm832, 1, 0
    %v834 = vadd.s32 %v824, %v828
    %v835 = vadd.s32 %v827, %v833
    %vm836 = vc.u32 %v834, %v830
    %v837 = vsel %vm836, 1, 0
    %v838 = vadd.s32 %v834, %v830
    %v839 = vadd.s32 %v835, %v837
    %v840 = vadd.s32 %v839, %v829
    %v841 = vadd.s32 %v840, %v831
    %v842 = vand.u32 %v819, 65535
    %v843 = vshrl.u32 %v819, 16
    %v844 = vand.u32 %v814, 65535
    %v845 = vshrl.u32 %v814, 16
    %v846 = vmul.u32 %v842, %v844
    %v847 = vmul.u32 %v842, %v845
    %v848 = vmul.u32 %v843, %v844
    %v849 = vmul.u32 %v843, %v845
    %v850 = vshll.u32 %v847, 16
    %v851 = vshrl.u32 %v847, 16
    %v852 = vshll.u32 %v848, 16
    %v853 = vshrl.u32 %v848, 16
    %vm854 = vc.u32 %v846, %v850
    %v855 = vsel %vm854, 1, 0
    %v856 = vadd.s32 %v846, %v850
    %v857 = vadd.s32 %v849, %v855
    %vm858 = vc.u32 %v856, %v852
    %v859 = vsel %vm858, 1, 0
    %v860 = vadd.s32 %v856, %v852
    %v861 = vadd.s32 %v857, %v859
    %v862 = vadd.s32 %v861, %v851
    %v863 = vadd.s32 %v862, %v853
    %v864 = vmul.u32 %v819, %v810
    %v865 = vadd.s32 %v841, %v860
    %vm866 = vc.u32 %v841, %v860
    %v867 = vadd.s32 %v863, 1
    %v868 = vsel %vm866, %v867, %v863
    %v869 = vadd.s32 %v864, %v868
    %v870 = vadd.s32 %v869, 536870912
    %v871 = vshrl.u32 %v870, 30
    %v872 = vshll.u32 %v871, 30
    %v873 = vsub.s32 %v869, %v872
    %vm874 = vcmp.lt.s32.totalorder %v873, 0
    %v875 = vsub.s32 0, %v873
    %v876 = vsel %vm874, %v875, %v873
    %v877 = vclz %v876
    %v878 = vsub.s32 %v877, 2
    %vm879 = vcmp.gt.s32.totalorder 0, %v878
    %v880 = vsel %vm879, 0, %v878
    %v881 = vsub.s32 32, %v880
    %v882 = vshll.u32 %v873, %v880
    %v883 = vshrl.u32 %v865, %v881
    %v884 = vor.u32 %v882, %v883
    %v885 = vsub.s32 4294967266, %v880
    %v886 = vadd.s32 %v885, 127
    %v887 = vshll.u32 %v886, 23
    %v888 = vor.u32 4788187, %v887
    %v889 = vand.u32 2147483647, %v888
    %v891 = vcvt.s32.f32 %v884
    %v892 = vmul.f32 %v891, %v889
    %v893 = vxor.u32 %v892, 2147483648
    %v894 = vsel %vm773, %v893, %v892
    %v895 = vsub.s32 4, %v871
    %v896 = vsel %vm773, %v895, %v871
    %v897 = vsel %vm772, %v304, %v894
    %v898 = vsel %vm772, 0, %v896
    %v899 = vmul.f32 %v897, %v897
    %v900 = vmul.f32 %v899, -0.001358992
    %v901 = vadd.f32 %v900, 0.041655596
    %v902 = vmul.f32 %v899, %v901
    %v903 = vadd.f32 %v902, -0.4999988
    %v904 = vmul.f32 %v899, %v903
    %v905 = vadd.f32 1.0, %v904
    %v906 = vmul.f32 %v897, %v897
    %v907 = vmul.f32 %v906, -0.00019511016
    %v908 = vadd.f32 %v907, 0.008332121
    %v909 = vmul.f32 %v906, %v908
    %v910 = vadd.f32 %v909, -0.16666654
    %v911 = vmul.f32 %v906, %v910
    %v912 = vadd.f32 %v911, 1.0
    %v913 = vmul.f32 %v912, %v897
    %vm914 = vweird.f32 %v304
    %v915 = vadd.s32 %v898, 3
    %v916 = vand.u32 %v915, 3
    %vm917 = vcmp.lt.s32.totalorder %v916, 2
    %vm918 = vcmp.eq.s32.totalorder %v916, 0
    %v919 = vxor.u32 %v913, 2147483648
    %v920 = vsel %vm918, %v905, %v919
    %vm921 = vcmp.eq.s32.totalorder %v916, 2
    %v922 = vxor.u32 %v905, 2147483648
    %v923 = vsel %vm921, %v922, %v913
    %v924 = vsel %vm917, %v920, %v923
    %v925 = vsel %vm914, nan, %v924
    %v926 = vsel %vm305, 1, 0
    %v927 = vperm.slane %v926, 0
    %vm928 = vcmp.eq.s32.totalorder %v927, 1
    %v929 = vsel %vm928, %v301, %v460
    %v930 = vsel %vm928, %v302, %v615
    %v931 = vsel %vm928, %v303, %v770
    %v932 = vsel %vm928, %v304, %v925
    %933 = vst [vmem:[#allocation2] sm:$0xff] %v929
    %934 = vst [vmem:[#allocation2 + $0x8] sm:$0xff] %v930
    %935 = vst [vmem:[#allocation2 + $0x10] sm:$0xff] %v931
    %936 = vst [vmem:[#allocation2 + $0x18] sm:$0xff] %v932
    // Predicated region
    $region14: #{tpu_custom_call.1} parent=1 // pred_check
      _
    $region15: #{tpu_custom_call.1} parent=1 // pred_check_branch
      %938 = sbr.rel (0) target = $region17
    $region16: #{tpu_custom_call.1} parent=1 // pred_region
      %940 = vsyncadd [#allocation3], 0
      %s941 = sshll.u32 [#allocation2], 4
      %s942 = int_to_ptr.vmem [resolvable:$true] %s941
      %s943 = sshll.u32 %s3, 4
      %s944 = int_to_ptr.hbm [resolvable:$true] %s943
      %949 = dma.vmem_to_hbm [thread:$0]  %s942, 512, %s944, [#allocation3], 128, 128, 8
    $region17: #{tpu_custom_call.1} parent=1 // pred_fallthru
      _
    // Predicated region
    $region18: #{tpu_custom_call.1} parent=1 // pred_check
      _
    $region19: #{tpu_custom_call.1} parent=1 // pred_check_branch
      %951 = sbr.rel (0) target = $region21
    $region20: #{tpu_custom_call.1} parent=1 // pred_region
      %953 = dma.done [#allocation3], 512
    $region21: #{tpu_custom_call.1} parent=1 // pred_fallthru
      _
    %954 = vsyncpa [#allocation3], 1

</llo_original>
